<compile_context>
chip_gen: v6e
topology: v6e:2x2x1
jax: 0.10.0
libtpu: 0.0.40
codegen_flags: <defaults>
</compile_context>

<pallas_src>
import functools
import math

import jax
import jax.numpy as jnp
from jax import lax
from jax.experimental import pallas as pl
from jax.experimental.pallas import tpu as pltpu

GAMMA = 2      # module default (Python int -> integer_pow, exact & cheap)
EPS = 1e-7     # declared in the module __init__ but unused in forward (kept for parity)

_LANE = 128


def _depth_focal_kernel(x_ref, y_ref, out_ref, *, tile_rows, blocks_per_chunk, n_valid):
    # x_ref, y_ref: (tile_rows, 128) blocks in VMEM (native dtype, cast here)
    # out_ref:      (1, 8, 128) f32 partial-sum accumulator for this chunk
    #               (block index depends only on the parallel chunk axis, so it
    #               stays resident across the reduction axis).
    c = pl.program_id(0)   # chunk (parallel across TensorCores on v7x)
    i = pl.program_id(1)   # row-block within the chunk (reduction axis)

    @pl.when(i == 0)
    def _init():
        out_ref[...] = jnp.zeros_like(out_ref)

    d = x_ref[...].astype(jnp.float32) - y_ref[...].astype(jnp.float32)
    sq = d * d                                   # (tile_rows, 128)

    # Global (unclamped) block index / element offset of this grid step.
    # NOTE: int32 element indexing -> supports up to ~2.1e9 elements.
    blk = c * blocks_per_chunk + i
    block_elems = tile_rows * _LANE
    block_start = blk * block_elems
    is_full = block_start + block_elems <= n_valid

    def _accum(vals):
        # (tile_rows,128) -> (tile_rows//8, 8, 128): layout-preserving split of
        # the sublane axis; the axis-0 reduce is plain vreg-wise VPU adds.
        out_ref[...] += jnp.sum(vals.reshape(-1, 8, _LANE), axis=0, keepdims=True)

    @pl.when(is_full)
    def _interior():          # fast path: no mask work on interior blocks
        _accum(sq)

    @pl.when(jnp.logical_not(is_full))
    def _boundary():          # ragged tail / phantom block: mask by global index
        row_id = lax.broadcasted_iota(jnp.int32, (tile_rows, _LANE), 0)
        lane_id = lax.broadcasted_iota(jnp.int32, (tile_rows, _LANE), 1)
        gidx = block_start + row_id * _LANE + lane_id
        _accum(jnp.where(gidx < n_valid, sq, 0.0))


def depth_focal_loss(pred: jax.Array, target: jax.Array,
                     gamma: int = GAMMA, tile_rows: int | None = None) -> jax.Array:
    """Computes (mean((pred - target)^2)) ** gamma with one streaming Pallas kernel."""
    assert pred.shape == target.shape, (pred.shape, target.shape)
    n_elems = math.prod(pred.shape)

    itemsize = max(jnp.dtype(pred.dtype).itemsize, jnp.dtype(target.dtype).itemsize)
    sub = max(8, 32 // itemsize)          # sublane pack: 8 (f32) / 16 (bf16) / 32 (int8/fp8)

    x = pred.reshape(-1)
    y = target.reshape(-1)

    # Only a <=127-element pad when the element count is not lane-aligned
    # (needed for the (rows, 128) view). The old tile-multiple full-array pad
    # is gone -- ragged blocks are masked inside the kernel instead.
    n_lane = pl.cdiv(n_elems, _LANE) * _LANE
    if n_lane != n_elems:
        x = jnp.pad(x, (0, n_lane - n_elems))
        y = jnp.pad(y, (0, n_lane - n_elems))
    rows = n_lane // _LANE

    if tile_rows is None:
        # ~4 MiB per input block (dtype-aware): 8192 rows f32, 16384 rows bf16.
        tile_rows = (4 * 1024 * 1024) // (_LANE * itemsize)
    tile_rows = max(sub, (tile_rows // sub) * sub)          # multiple of sublane pack
    tile_rows = min(tile_rows, pl.cdiv(rows, sub) * sub)    # don't exceed data extent

    num_blocks = pl.cdiv(rows, tile_rows)
    n_chunks = 2 if num_blocks >= 2 else 1                  # one chunk per v7x TensorCore
    blocks_per_chunk = pl.cdiv(num_blocks, n_chunks)

    x2 = x.reshape(rows, _LANE)
    y2 = y.reshape(rows, _LANE)

    def in_map(c, i):
        blk = c * blocks_per_chunk + i
        # clamp phantom blocks (odd num_blocks) onto the last real block; their
        # contribution is fully masked out inside the kernel.
        return (jnp.minimum(blk, num_blocks - 1), 0)

    kernel = functools.partial(
        _depth_focal_kernel,
        tile_rows=tile_rows,
        blocks_per_chunk=blocks_per_chunk,
        n_valid=n_elems,
    )

    bytes_in = n_lane * (jnp.dtype(pred.dtype).itemsize + jnp.dtype(target.dtype).itemsize)
    cost = pl.CostEstimate(
        flops=3 * n_lane,                 # sub + mul + add per element
        transcendentals=0,
        bytes_accessed=bytes_in + n_chunks * 8 * _LANE * 4,
    )

    partials = pl.pallas_call(
        kernel,
        out_shape=jax.ShapeDtypeStruct((n_chunks, 8, _LANE), jnp.float32),
        grid_spec=pltpu.PrefetchScalarGridSpec(
            num_scalar_prefetch=0,
            grid=(n_chunks, blocks_per_chunk),
            in_specs=[
                pl.BlockSpec((tile_rows, _LANE), in_map),
                pl.BlockSpec((tile_rows, _LANE), in_map),
            ],
            # lane-dense per-chunk accumulator; index depends only on the
            # parallel axis -> resident across the reduction axis.
            out_specs=pl.BlockSpec((1, 8, _LANE), lambda c, i: (c, 0, 0)),
        ),
        compiler_params=pltpu.CompilerParams(
            dimension_semantics=("parallel", "arbitrary"),
            # 2 inputs x 2 buffers x ~4 MiB ~= 16 MiB; headroom but < v7x 64 MiB.
            vmem_limit_bytes=48 * 1024 * 1024,
        ),
        cost_estimate=cost,
    )(x2, y2)

    mse = jnp.sum(partials) / jnp.float32(n_elems)   # MSELoss(reduction='mean')
    return mse ** gamma                              # loss ** gamma; .mean() of a scalar is a no-op


if __name__ == "__main__":
    key = jax.random.PRNGKey(0)
    k1, k2, k3, k4, k5, k6, k7, k8 = jax.random.split(key, 8)

    def ref_loss(p, t, gamma=GAMMA):
        pf = p.astype(jnp.float32)
        tf = t.astype(jnp.float32)
        return jnp.mean((pf - tf) ** 2) ** gamma

    # 1) small depth-map shaped inputs: single partial block (mask path)
    pred = jax.random.normal(k1, (2, 1, 16, 16), dtype=jnp.float32)
    target = jax.random.normal(k2, (2, 1, 16, 16), dtype=jnp.float32)
    loss = depth_focal_loss(pred, target)
    jax.block_until_ready(loss)
    assert jnp.allclose(loss, ref_loss(pred, target), rtol=1e-5, atol=1e-6), \
        (loss, ref_loss(pred, target))

    # 2) force the 2-chunk parallel grid (exercises per-chunk partial sums)
    pred2 = jax.random.normal(k3, (2, 1, 32, 32), dtype=jnp.float32)    # 2048 elems = 16 rows
    target2 = jax.random.normal(k4, (2, 1, 32, 32), dtype=jnp.float32)
    loss2 = depth_focal_loss(pred2, target2, tile_rows=8)               # grid = (2, 1)
    jax.block_until_ready(loss2)
    assert jnp.allclose(loss2, ref_loss(pred2, target2), rtol=1e-5, atol=1e-6), \
        (loss2, ref_loss(pred2, target2))

    # 3) odd block count -> clamped + fully-masked phantom block on chunk 1
    pred3 = jax.random.normal(k5, (2, 1, 32, 48), dtype=jnp.float32)    # 3072 elems = 24 rows
    target3 = jax.random.normal(k6, (2, 1, 32, 48), dtype=jnp.float32)
    loss3 = depth_focal_loss(pred3, target3, tile_rows=8)               # grid = (2, 2)
    jax.block_until_ready(loss3)
    assert jnp.allclose(loss3, ref_loss(pred3, target3), rtol=1e-5, atol=1e-6), \
        (loss3, ref_loss(pred3, target3))

    # 4) element count not a multiple of 128 + bf16 inputs (16-row sublane pack)
    pred4 = jax.random.normal(k7, (2, 3, 7, 11), dtype=jnp.bfloat16)    # 462 elems
    target4 = jax.random.normal(k8, (2, 3, 7, 11), dtype=jnp.bfloat16)
    loss4 = depth_focal_loss(pred4, target4)
    jax.block_until_ready(loss4)
    assert jnp.allclose(loss4, ref_loss(pred4, target4), rtol=1e-4, atol=1e-6), \
        (loss4, ref_loss(pred4, target4))

    print("KERNEL_OK")
</pallas_src>

<mosaic_0001>
module attributes {stable_mosaic.version = 11 : i64} {
  func.func @_depth_focal_kernel(%arg0: i32, %arg1: i32, %arg2: memref<8x128xf32, #tpu.memory_space<vmem>>, %arg3: memref<8x128xf32, #tpu.memory_space<vmem>>, %arg4: memref<1x8x128xf32, #tpu.memory_space<vmem>>) attributes {dimension_semantics = [#tpu.dimension_semantics<parallel>, #tpu.dimension_semantics<arbitrary>], iteration_bounds = array<i64: 1, 1>, scalar_prefetch = 0 : i64, scratch_operands = 0 : i64, tpu.core_type = #tpu.core_type<tc>, window_params = [{transform_indices = @transform_0, window_bounds = array<i64: 8, 128>}, {transform_indices = @transform_1, window_bounds = array<i64: 8, 128>}, {transform_indices = @transform_2, window_bounds = array<i64: 1, 8, 128>}]} {
    %c0_i32 = arith.constant 0 : i32
    %0 = arith.cmpi eq, %arg1, %c0_i32 : i32
    %1 = arith.extui %0 : i1 to i32
    %c0_i32_0 = arith.constant 0 : i32
    %2 = arith.cmpi ne, %1, %c0_i32_0 : i32
    scf.if %2 {
      %cst = arith.constant 0.000000e+00 : f32
      %17 = vector.broadcast %cst : f32 to vector<1x8x128xf32>
      %c0_7 = arith.constant 0 : index
      %c0_8 = arith.constant 0 : index
      %c0_9 = arith.constant 0 : index
      %18 = vector.load %arg4[%c0_7, %c0_8, %c0_9] : memref<1x8x128xf32, #tpu.memory_space<vmem>>, vector<1x8x128xf32>
      tpu.vector_store %arg4[%c0_7, %c0_8, %c0_9], %17 {strides = array<i32>} : memref<1x8x128xf32, #tpu.memory_space<vmem>>, vector<1x8x128xf32>,
    } else {
    }
    %c0 = arith.constant 0 : index
    %c0_1 = arith.constant 0 : index
    %3 = vector.load %arg2[%c0, %c0_1] : memref<8x128xf32, #tpu.memory_space<vmem>>, vector<8x128xf32>
    %c0_2 = arith.constant 0 : index
    %c0_3 = arith.constant 0 : index
    %4 = vector.load %arg3[%c0_2, %c0_3] : memref<8x128xf32, #tpu.memory_space<vmem>>, vector<8x128xf32>
    %5 = arith.subf %3, %4 : vector<8x128xf32>
    %6 = arith.mulf %5, %5 : vector<8x128xf32>
    %c1_i32 = arith.constant 1 : i32
    %7 = arith.muli %arg0, %c1_i32 : i32
    %8 = arith.addi %7, %arg1 : i32
    %c1024_i32 = arith.constant 1024 : i32
    %9 = arith.muli %8, %c1024_i32 : i32
    %c1024_i32_4 = arith.constant 1024 : i32
    %10 = arith.addi %9, %c1024_i32_4 : i32
    %c512_i32 = arith.constant 512 : i32
    %11 = arith.cmpi sle, %10, %c512_i32 : i32
    %12 = arith.extui %11 : i1 to i32
    %c0_i32_5 = arith.constant 0 : i32
    %13 = arith.cmpi ne, %12, %c0_i32_5 : i32
    scf.if %13 {
      %c0_7 = arith.constant 0 : index
      %c0_8 = arith.constant 0 : index
      %c0_9 = arith.constant 0 : index
      %17 = vector.load %arg4[%c0_7, %c0_8, %c0_9] : memref<1x8x128xf32, #tpu.memory_space<vmem>>, vector<1x8x128xf32>
      %18 = vector.shape_cast %6 : vector<8x128xf32> to vector<1x8x128xf32>
      %cst = arith.constant dense<0.000000e+00> : vector<8x128xf32>
      %19 = vector.multi_reduction <add>, %18, %cst [0] : vector<1x8x128xf32> to vector<8x128xf32>
      %20 = vector.shape_cast %19 : vector<8x128xf32> to vector<1x8x128xf32>
      %21 = arith.addf %17, %20 : vector<1x8x128xf32>
      %c0_10 = arith.constant 0 : index
      %c0_11 = arith.constant 0 : index
      %c0_12 = arith.constant 0 : index
      %22 = vector.load %arg4[%c0_10, %c0_11, %c0_12] : memref<1x8x128xf32, #tpu.memory_space<vmem>>, vector<1x8x128xf32>
      tpu.vector_store %arg4[%c0_10, %c0_11, %c0_12], %21 {strides = array<i32>} : memref<1x8x128xf32, #tpu.memory_space<vmem>>, vector<1x8x128xf32>,
    } else {
    }
    %true = arith.constant true
    %14 = arith.xori %11, %true : i1
    %15 = arith.extui %14 : i1 to i32
    %c0_i32_6 = arith.constant 0 : i32
    %16 = arith.cmpi ne, %15, %c0_i32_6 : i32
    scf.if %16 {
      %17 = tpu.iota {dimensions = array<i32: 0>} : vector<8x128xi32>
      %18 = tpu.iota {dimensions = array<i32: 1>} : vector<8x128xi32>
      %c128_i32 = arith.constant 128 : i32
      %19 = vector.broadcast %c128_i32 : i32 to vector<8x128xi32>
      %20 = arith.muli %17, %19 : vector<8x128xi32>
      %21 = vector.broadcast %9 : i32 to vector<8x128xi32>
      %22 = arith.addi %21, %20 : vector<8x128xi32>
      %23 = arith.addi %22, %18 : vector<8x128xi32>
      %c512_i32_7 = arith.constant 512 : i32
      %24 = vector.broadcast %c512_i32_7 : i32 to vector<8x128xi32>
      %25 = arith.cmpi slt, %23, %24 : vector<8x128xi32>
      %cst = arith.constant 0.000000e+00 : f32
      %26 = vector.broadcast %cst : f32 to vector<8x128xf32>
      %27 = arith.select %25, %6, %26 : vector<8x128xi1>, vector<8x128xf32>
      %c0_8 = arith.constant 0 : index
      %c0_9 = arith.constant 0 : index
      %c0_10 = arith.constant 0 : index
      %28 = vector.load %arg4[%c0_8, %c0_9, %c0_10] : memref<1x8x128xf32, #tpu.memory_space<vmem>>, vector<1x8x128xf32>
      %29 = vector.shape_cast %27 : vector<8x128xf32> to vector<1x8x128xf32>
      %cst_11 = arith.constant dense<0.000000e+00> : vector<8x128xf32>
      %30 = vector.multi_reduction <add>, %29, %cst_11 [0] : vector<1x8x128xf32> to vector<8x128xf32>
      %31 = vector.shape_cast %30 : vector<8x128xf32> to vector<1x8x128xf32>
      %32 = arith.addf %28, %31 : vector<1x8x128xf32>
      %c0_12 = arith.constant 0 : index
      %c0_13 = arith.constant 0 : index
      %c0_14 = arith.constant 0 : index
      %33 = vector.load %arg4[%c0_12, %c0_13, %c0_14] : memref<1x8x128xf32, #tpu.memory_space<vmem>>, vector<1x8x128xf32>
      tpu.vector_store %arg4[%c0_12, %c0_13, %c0_14], %32 {strides = array<i32>} : memref<1x8x128xf32, #tpu.memory_space<vmem>>, vector<1x8x128xf32>,
    } else {
    }
    return
  }
  func.func @transform_0(%arg0: i32, %arg1: i32) -> (i32, i32) {
    %c1_i32 = arith.constant 1 : i32
    %0 = arith.muli %arg0, %c1_i32 : i32
    %1 = arith.addi %0, %arg1 : i32
    %c0_i32 = arith.constant 0 : i32
    %2 = arith.minsi %1, %c0_i32 : i32
    %c0_i32_0 = arith.constant 0 : i32
    %c0_i32_1 = arith.constant 0 : i32
    return %2, %c0_i32_0 : i32, i32
  }
  func.func @transform_1(%arg0: i32, %arg1: i32) -> (i32, i32) {
    %c1_i32 = arith.constant 1 : i32
    %0 = arith.muli %arg0, %c1_i32 : i32
    %1 = arith.addi %0, %arg1 : i32
    %c0_i32 = arith.constant 0 : i32
    %2 = arith.minsi %1, %c0_i32 : i32
    %c0_i32_0 = arith.constant 0 : i32
    %c0_i32_1 = arith.constant 0 : i32
    return %2, %c0_i32_0 : i32, i32
  }
  func.func @transform_2(%arg0: i32, %arg1: i32) -> (i32, i32, i32) {
    %c0_i32 = arith.constant 0 : i32
    %c0_i32_0 = arith.constant 0 : i32
    %c0_i32_1 = arith.constant 0 : i32
    return %arg0, %c0_i32, %c0_i32_0 : i32, i32, i32
  }
}

</mosaic_0001>

<llo_original>
// kernel: tpu_custom_call.1
$region0: #{tpu_custom_call.1}
  #allocation0 [shape = 'u32[]', space=smem, size = 0x4, offset = 0x4, fixed_abs, tag = 'smem constant byte address 0x4 - core index']
  #allocation1 [shape = 'u32[144,128]{1,0:T(1,128)}', space=vmem, size = 0x12000, scoped, tag = 'internal scratch']
  %s0 = inlined_call_operand.hbm [shape: f32[4,128], index: 0, kind: input, shape index: {}]
  %s1 = inlined_call_operand.hbm [shape: f32[4,128], index: 1, kind: input, shape index: {}]
  %s2 = inlined_call_operand.hbm [shape: f32[1,8,128], index: 2, kind: output, shape index: {}]
  %s3 = sld [smem:[#allocation0]]
  $region38: #{tpu_custom_call.1} parent=0
    _
  %s5 = ssub.s32 1, %s3
  %s6 = scalar_select 0, %s5, %s3
  $region1: #{tpu_custom_call.1} parent=0
    #allocation2 [shape = 'u8[4096]{0}', space=vmem, size = 0x1000, scoped, tag = 'input window, operand 0, single buffered']
    #allocation3 [shape = 's32[1]{0}', space=sflag, size = 0x4, scoped, tag = 'scoped memory for tpu_custom_call.1']
    #allocation4 [shape = 's32[1]{0}', space=sflag, size = 0x4, scoped, tag = 'scoped memory for tpu_custom_call.1']
    #allocation5 [shape = 'u8[4096]{0}', space=vmem, size = 0x1000, scoped, tag = 'input window, operand 1, single buffered']
    #allocation6 [shape = 's32[1]{0}', space=sflag, size = 0x4, scoped, tag = 'scoped memory for tpu_custom_call.1']
    #allocation7 [shape = 'u8[4096]{0}', space=vmem, size = 0x1000, scoped, tag = 'output window, operand 0, single buffered']
    %7 = vsyncpa [#allocation3], 0
    %8 = vsyncpa [#allocation6], 0
    %9 = vsyncpa [#allocation4], 0
    // Predicated region
    $region2: #{tpu_custom_call.1} parent=1 // pred_check
      _
    $region3: #{tpu_custom_call.1} parent=1 // pred_check_branch
      %11 = sbr.rel (0) target = $region5
    $region4: #{tpu_custom_call.1} parent=1 // pred_region
      %s12 = sadd.s32 0, 0
      %p13 = scmp.lt.s32.totalorder %s12, 0
      %s14 = scalar_select %p13, %s12, 0
      %s15 = smul.u32 2, %s14
      %s16 = ssub.s32 1, %s15
      %s17 = smul.u32 64, %s16
      %s19 = ssub.s32 128, %s17
      %20 = vsyncadd [#allocation3], %s19
      %p21 = scmp.ne.s32.totalorder 0, %s17
      %s22 = smul.addr %s15, 64
      %s23 = scalar_lea.hbm %s0, %s22
      %s24 = smul.u32 4, %s16
      %s25 = sshll.u32 [#allocation2], 4
      %s26 = int_to_ptr.vmem [resolvable:$true] %s25
      %s27 = sshll.u32 %s24, 4
      %31 = dma.hbm_to_vmem [thread:$0]  (%p21), %s23, %s27, %s26, [#allocation3], 64, 64, 4
    $region5: #{tpu_custom_call.1} parent=1 // pred_fallthru
      _
    // Predicated region
    $region6: #{tpu_custom_call.1} parent=1 // pred_check
      _
    $region7: #{tpu_custom_call.1} parent=1 // pred_check_branch
      %33 = sbr.rel (0) target = $region9
    $region8: #{tpu_custom_call.1} parent=1 // pred_region
      %s34 = sadd.s32 0, 0
      %p35 = scmp.lt.s32.totalorder %s34, 0
      %s36 = scalar_select %p35, %s34, 0
      %s37 = smul.u32 2, %s36
      %s38 = ssub.s32 1, %s37
      %s39 = smul.u32 64, %s38
      %s41 = ssub.s32 128, %s39
      %42 = vsyncadd [#allocation6], %s41
      %p43 = scmp.ne.s32.totalorder 0, %s39
      %s44 = smul.addr %s37, 64
      %s45 = scalar_lea.hbm %s1, %s44
      %s46 = smul.u32 4, %s38
      %s47 = sshll.u32 [#allocation5], 4
      %s48 = int_to_ptr.vmem [resolvable:$true] %s47
      %s49 = sshll.u32 %s46, 4
      %53 = dma.hbm_to_vmem [thread:$0]  (%p43), %s45, %s49, %s48, [#allocation6], 64, 64, 4
    $region9: #{tpu_custom_call.1} parent=1 // pred_fallthru
      _
    // Predicated region
    $region10: #{tpu_custom_call.1} parent=1 // pred_check
      _
    $region11: #{tpu_custom_call.1} parent=1 // pred_check_branch
      %55 = sbr.rel (0) target = $region13
    $region12: #{tpu_custom_call.1} parent=1 // pred_region
      %56 = dma.done [#allocation3], 128
    $region13: #{tpu_custom_call.1} parent=1 // pred_fallthru
      _
    // Predicated region
    $region14: #{tpu_custom_call.1} parent=1 // pred_check
      _
    $region15: #{tpu_custom_call.1} parent=1 // pred_check_branch
      %58 = sbr.rel (0) target = $region17
    $region16: #{tpu_custom_call.1} parent=1 // pred_region
      %59 = dma.done [#allocation6], 128
    $region17: #{tpu_custom_call.1} parent=1 // pred_fallthru
      _
    %s60 = sadd.s32 0, 0
    %p61 = scmp.lt.s32.totalorder %s60, 0
    %s62 = scalar_select %p61, %s60, 0
    %s63 = smul.u32 2, %s62
    %s64 = ssub.s32 1, %s63
    %s65 = smul.u32 64, %s64
    %s66 = sadd.s32 0, 0
    %p67 = scmp.lt.s32.totalorder %s66, 0
    %s68 = scalar_select %p67, %s66, 0
    %s69 = smul.u32 2, %s68
    %s70 = ssub.s32 1, %s69
    %s71 = smul.u32 64, %s70
    %p72 = scmp.eq.s32.totalorder 0, 0
    // Predicated region
    $region18: #{tpu_custom_call.1} parent=1 // pred_check
      %p73 = pneg %p72
    $region19: #{tpu_custom_call.1} parent=1 // pred_check_branch
      %75 = sbr.rel (%p73) target = $region21
    $region20: #{tpu_custom_call.1} parent=1 // pred_region
      %76 = vst [vmem:[#allocation7] sm:$0xff] 0.0
    $region21: #{tpu_custom_call.1} parent=1 // pred_fallthru
      _
    %v77 = vld [vmem:[#allocation2] sm:$0xff]
    %v78 = vld [vmem:[#allocation5] sm:$0xff]
    %v79 = vsub.f32 %v77, %v78
    %v80 = vmul.f32 %v79, %v79
    %s81 = sadd.s32 0, 0
    %s82 = smul.u32 %s81, 1024
    %s83 = sadd.s32 %s82, 1024
    %p84 = scmp.le.s32.totalorder %s83, 512
    // Predicated region
    $region22: #{tpu_custom_call.1} parent=1 // pred_check
      %p85 = pneg %p84
    $region23: #{tpu_custom_call.1} parent=1 // pred_check_branch
      %87 = sbr.rel (%p85) target = $region25
    $region24: #{tpu_custom_call.1} parent=1 // pred_region
      %v88 = vld [vmem:[#allocation7] sm:$0xff]
      %v89 = vadd.f32 %v80, 0.0
      %v90 = vadd.f32 %v88, %v89
      %91 = vst [vmem:[#allocation7] sm:$0xff] %v90
    $region25: #{tpu_custom_call.1} parent=1 // pred_fallthru
      _
    %p92 = scmp.gt.s32.totalorder %s83, 512
    // Predicated region
    $region26: #{tpu_custom_call.1} parent=1 // pred_check
      %p93 = pneg %p92
    $region27: #{tpu_custom_call.1} parent=1 // pred_check_branch
      %95 = sbr.rel (%p93) target = $region29
    $region28: #{tpu_custom_call.1} parent=1 // pred_region
      %v96 = vlaneseq
      %v97 = vshrl.u32 %v96, 7
      %v98 = vlaneseq
      %v99 = vand.u32 %v98, 127
      %v100 = vmul.u32 %v97, 128
      %v101 = vstv %s82
      %v102 = vadd.s32 %v101, %v100
      %v103 = vadd.s32 %v102, %v99
      %vm104 = vcmp.lt.s32.totalorder %v103, 512
      %v105 = vsel %vm104, %v80, 0.0
      %v106 = vld [vmem:[#allocation7] sm:$0xff]
      %v107 = vadd.f32 %v105, 0.0
      %v108 = vadd.f32 %v106, %v107
      %109 = vst [vmem:[#allocation7] sm:$0xff] %v108
    $region29: #{tpu_custom_call.1} parent=1 // pred_fallthru
      _
    // Predicated region
    $region30: #{tpu_custom_call.1} parent=1 // pred_check
      _
    $region31: #{tpu_custom_call.1} parent=1 // pred_check_branch
      %111 = sbr.rel (0) target = $region33
    $region32: #{tpu_custom_call.1} parent=1 // pred_region
      %s113 = ssub.s32 128, 128
      %114 = vsyncadd [#allocation4], %s113
      %s116 = sshll.u32 [#allocation7], 4
      %s117 = int_to_ptr.vmem [resolvable:$true] %s116
      %119 = dma.vmem_to_hbm [thread:$0]  %s117, 128, %s2, [#allocation4]
    $region33: #{tpu_custom_call.1} parent=1 // pred_fallthru
      _
    // Predicated region
    $region34: #{tpu_custom_call.1} parent=1 // pred_check
      _
    $region35: #{tpu_custom_call.1} parent=1 // pred_check_branch
      %121 = sbr.rel (0) target = $region37
    $region36: #{tpu_custom_call.1} parent=1 // pred_region
      %122 = dma.done [#allocation4], 128
    $region37: #{tpu_custom_call.1} parent=1 // pred_fallthru
      _
    %123 = vsyncpa [#allocation3], 1
    %124 = vsyncpa [#allocation6], 1
    %125 = vsyncpa [#allocation4], 1

</llo_original>
